<compile_context>
chip_gen: v5e
topology: v5e:2x2
jax: 0.10.0
libtpu: 0.0.40
codegen_flags: <defaults>
</compile_context>

<pallas_src>
import functools

import jax
import jax.numpy as jnp
from jax.experimental import pallas as pl
from jax.experimental.pallas import tpu as pltpu


def _glove_kernel(xmax, alpha, bs, wtab_ref, ctab_ref, idx_ref, co_ref, out_ref):
    # wtab_ref : (E+2, V)  [emb_word.T ; bias_word.T ; ones       ]  (VMEM resident)
    # ctab_ref : (E+2, V)  [emb_ctx.T  ; ones        ; bias_ctx.T ]  (VMEM resident)
    # idx_ref  : (2, TB)   row 0 = word ids, row 1 = context ids (int32)
    # co_ref   : (1, TB)   co-occurrence counts (padded lanes = 1.0)
    # out_ref  : (1, 128)  partial loss of this tile, written to lane 0
    n_rows, vocab = wtab_ref.shape
    tb = idx_ref.shape[1]

    widx = idx_ref[0:1, :]                                     # (1, TB)
    cidx = idx_ref[1:2, :]                                     # (1, TB)

    # One-hot gather on the MXU: exact for 0/1 f32 operands, lane-dense output.
    viota = jax.lax.broadcasted_iota(jnp.int32, (vocab, tb), 0)
    w_onehot = (viota == widx).astype(jnp.float32)             # (V, TB)
    c_onehot = (viota == cidx).astype(jnp.float32)             # (V, TB)
    wg = jnp.dot(wtab_ref[...], w_onehot,
                 preferred_element_type=jnp.float32)           # (E+2, TB)
    cg = jnp.dot(ctab_ref[...], c_onehot,
                 preferred_element_type=jnp.float32)           # (E+2, TB)

    # sum_e we*ce + bias_w*1 + 1*bias_c, thanks to the [bias; ones] rows.
    score = jnp.sum(wg * cg, axis=0, keepdims=True)            # (1, TB)

    co = co_ref[...]                                           # (1, TB), > 0
    diff = score - jnp.log(co)
    # weight_fn: (x / xmax) ** alpha if x < xmax else 1
    weight = jnp.where(co < xmax, (co / xmax) ** alpha, jnp.ones_like(co))
    err = diff * diff * weight                                 # (1, TB)

    # Zero the padded lanes (global pair index >= true batch size).
    gidx = pl.program_id(0) * tb + jax.lax.broadcasted_iota(jnp.int32, (1, tb), 1)
    err = jnp.where(gidx < bs, err, 0.0)

    partial = jnp.sum(err, keepdims=True)                      # (1, 1)
    lane = jax.lax.broadcasted_iota(jnp.int32, (1, 128), 1)
    out_ref[...] = jnp.where(lane == 0, partial, 0.0)


def _pick_tile(bs, vocab, emb):
    """Largest lane-multiple tile whose VMEM working set fits a conservative
    budget (safe for v5e's 16 MiB scoped default and v7x's 64 MiB physical),
    while keeping >= 2 grid steps so both v7x TensorCores get work."""
    # Dominant per-column f32 bytes: 2 one-hots (vocab rows), 2 gathered slabs
    # + their product (3*(emb+2) rows), plus (1, TB) temporaries and the
    # double-buffered index/co input blocks.
    per_col = 4 * (2 * vocab + 3 * (emb + 2) + 16)
    budget = 16 * 1024 * 1024
    tb = max(128, (budget // per_col) // 128 * 128)
    tb = min(tb, 8192)                            # per-step overhead already <1%
    tb = min(tb, pl.cdiv(bs, 128) * 128)          # at most one tile's worth of pad
    if bs > 128:
        tb = min(tb, pl.cdiv(bs, 2 * 128) * 128)  # >= 2 grid steps (dual-TC v7x)
    return tb


@functools.partial(jax.jit, static_argnames=("xmax", "alpha"))
def glove_loss(word, context, emb_word, emb_ctx, bias_word, bias_ctx,
               comat, xmax, alpha):
    """Pallas implementation of GloveModel.forward. Returns the scalar loss."""
    bs = int(word.shape[0])
    vocab, emb = emb_word.shape

    word = word.astype(jnp.int32)
    context = context.astype(jnp.int32)

    tb = _pick_tile(bs, vocab, emb)
    bs_pad = pl.cdiv(bs, tb) * tb
    pad = bs_pad - bs
    n_steps = bs_pad // tb

    # Pad only the O(batch) index stream (never the gathered slabs).  Padded
    # lanes gather real row-0 values but are zeroed in-kernel by a lane mask.
    wp = jnp.pad(word, (0, pad))
    cp = jnp.pad(context, (0, pad))
    idx = jnp.stack([wp, cp], axis=0)                           # (2, bs_pad) int32

    # The only wrapper-side gather left: per-pair co-occurrences (O(batch)
    # scalars; comat may be far too large to keep resident in VMEM in general).
    co = comat[wp, cp].astype(jnp.float32)
    valid = jnp.arange(bs_pad) < bs
    co = jnp.where(valid, co, 1.0)[None, :]                     # (1, bs_pad), > 0

    # Transposed, bias-augmented tables (tiny: (E+2) x V), f32, VMEM-resident
    # across the whole grid (constant index_map => fetched once).
    ones = jnp.ones((1, vocab), jnp.float32)
    wtab = jnp.concatenate(
        [emb_word.T.astype(jnp.float32), bias_word.T.astype(jnp.float32), ones],
        axis=0)                                                 # (E+2, V)
    ctab = jnp.concatenate(
        [emb_ctx.T.astype(jnp.float32), ones, bias_ctx.T.astype(jnp.float32)],
        axis=0)                                                 # (E+2, V)
    # TODO(synk): for vocabularies too large for VMEM-resident tables / one-hot
    # gathers, fall back to wrapper-side XLA gathers directly into (E, batch).

    kernel = functools.partial(_glove_kernel, float(xmax), float(alpha), bs)

    partials = pl.pallas_call(
        kernel,
        out_shape=jax.ShapeDtypeStruct((1, 128 * n_steps), jnp.float32),
        grid=(n_steps,),
        in_specs=[
            pl.BlockSpec((emb + 2, vocab), lambda i: (0, 0)),   # word table (resident)
            pl.BlockSpec((emb + 2, vocab), lambda i: (0, 0)),   # ctx table (resident)
            pl.BlockSpec((2, tb), lambda i: (0, i)),            # [word; context] ids
            pl.BlockSpec((1, tb), lambda i: (0, i)),            # co-occurrences
        ],
        out_specs=pl.BlockSpec((1, 128), lambda i: (0, i)),
        compiler_params=pltpu.CompilerParams(
            dimension_semantics=("parallel",),                  # distinct out block/step
            vmem_limit_bytes=32 * 1024 * 1024),
    )(wtab, ctab, idx, co)

    return jnp.sum(partials)


def glove_loss_ref(word, context, emb_word, emb_ctx, bias_word, bias_ctx,
                   comat, xmax, alpha):
    """Pure-JAX reference mirroring the PyTorch forward."""
    we = emb_word[word]
    ce = emb_ctx[context]
    wb = bias_word[word, 0]
    cb = bias_ctx[context, 0]
    co = comat[word, context]
    wts = jnp.where(co < xmax, (co / xmax) ** alpha, 1.0)
    d = jnp.sum(we * ce, axis=1) + wb + cb - jnp.log(co)
    return jnp.sum(d * d * wts)


if __name__ == "__main__":
    vocabSize = 128
    embSize = 32
    bs = 1000            # pads to 1024 -> TB=512, grid=(2,) (>=2 steps for v7x)
    xmax = 2.0
    alpha = 0.75

    key = jax.random.PRNGKey(0)
    k_ew, k_ec, k_bw, k_bc, k_co, k_w, k_c = jax.random.split(key, 7)

    # nn.init.uniform_(params, a=-0.5, b=0.5) for all four embedding tables
    emb_word = jax.random.uniform(k_ew, (vocabSize, embSize), jnp.float32, -0.5, 0.5)
    emb_ctx = jax.random.uniform(k_ec, (vocabSize, embSize), jnp.float32, -0.5, 0.5)
    bias_word = jax.random.uniform(k_bw, (vocabSize, 1), jnp.float32, -0.5, 0.5)
    bias_ctx = jax.random.uniform(k_bc, (vocabSize, 1), jnp.float32, -0.5, 0.5)

    # Strictly-positive synthetic co-occurrence matrix (so log() is finite),
    # straddling xmax to exercise both weight_fn branches.
    comat = jax.random.uniform(k_co, (vocabSize, vocabSize), jnp.float32, 0.1, 5.0)

    word = jax.random.randint(k_w, (bs,), 0, vocabSize, jnp.int32)
    context = jax.random.randint(k_c, (bs,), 0, vocabSize, jnp.int32)

    loss = glove_loss(word, context, emb_word, emb_ctx, bias_word, bias_ctx,
                      comat, xmax=xmax, alpha=alpha)
    loss = jax.block_until_ready(loss)

    ref = glove_loss_ref(word, context, emb_word, emb_ctx, bias_word, bias_ctx,
                         comat, xmax, alpha)
    assert jnp.allclose(loss, ref, rtol=1e-4, atol=1e-2), (loss, ref)

    print("KERNEL_OK")
</pallas_src>

<mosaic_0001>
module attributes {stable_mosaic.version = 11 : i64} {
  func.func @_glove_kernel(%arg0: i32, %arg1: memref<34x128xf32, #tpu.memory_space<vmem>>, %arg2: memref<34x128xf32, #tpu.memory_space<vmem>>, %arg3: memref<2x512xi32, #tpu.memory_space<vmem>>, %arg4: memref<1x512xf32, #tpu.memory_space<vmem>>, %arg5: memref<1x128xf32, #tpu.memory_space<vmem>>) attributes {dimension_semantics = [#tpu.dimension_semantics<parallel>], iteration_bounds = array<i64: 2>, scalar_prefetch = 0 : i64, scratch_operands = 0 : i64, tpu.core_type = #tpu.core_type<tc>, window_params = [{pipeline_mode = #tpu.pipeline_mode<synchronous>, transform_indices = @transform_0, window_bounds = array<i64: 34, 128>}, {pipeline_mode = #tpu.pipeline_mode<synchronous>, transform_indices = @transform_1, window_bounds = array<i64: 34, 128>}, {transform_indices = @transform_2, window_bounds = array<i64: 2, 512>}, {transform_indices = @transform_3, window_bounds = array<i64: 1, 512>}, {transform_indices = @transform_4, window_bounds = array<i64: 1, 128>}]} {
    %c0 = arith.constant 0 : index
    %c0_0 = arith.constant 0 : index
    %0 = vector.load %arg3[%c0, %c0_0] : memref<2x512xi32, #tpu.memory_space<vmem>>, vector<1x512xi32>
    %c1 = arith.constant 1 : index
    %c0_1 = arith.constant 0 : index
    %1 = vector.load %arg3[%c1, %c0_1] : memref<2x512xi32, #tpu.memory_space<vmem>>, vector<1x512xi32>
    %2 = tpu.iota {dimensions = array<i32: 0>} : vector<128x512xi32>
    %3 = vector.broadcast %0 : vector<1x512xi32> to vector<128x512xi32>
    %4 = arith.cmpi eq, %2, %3 : vector<128x512xi32>
    %5 = arith.extui %4 : vector<128x512xi1> to vector<128x512xi32>
    %6 = arith.sitofp %5 : vector<128x512xi32> to vector<128x512xf32>
    %7 = vector.broadcast %1 : vector<1x512xi32> to vector<128x512xi32>
    %8 = arith.cmpi eq, %2, %7 : vector<128x512xi32>
    %9 = arith.extui %8 : vector<128x512xi1> to vector<128x512xi32>
    %10 = arith.sitofp %9 : vector<128x512xi32> to vector<128x512xf32>
    %c0_2 = arith.constant 0 : index
    %c0_3 = arith.constant 0 : index
    %11 = vector.load %arg1[%c0_2, %c0_3] : memref<34x128xf32, #tpu.memory_space<vmem>>, vector<34x128xf32>
    %cst = arith.constant dense<0.000000e+00> : vector<34x512xf32>
    %12 = tpu.matmul %11, %6, %cst {dimension_numbers = #tpu.dot_dimension_numbers<[1], [0], [0], [1], [0, 0, 1, 1], [], []>} : vector<34x128xf32>, vector<128x512xf32>, vector<34x512xf32> -> vector<34x512xf32>
    %c0_4 = arith.constant 0 : index
    %c0_5 = arith.constant 0 : index
    %13 = vector.load %arg2[%c0_4, %c0_5] : memref<34x128xf32, #tpu.memory_space<vmem>>, vector<34x128xf32>
    %cst_6 = arith.constant dense<0.000000e+00> : vector<34x512xf32>
    %14 = tpu.matmul %13, %10, %cst_6 {dimension_numbers = #tpu.dot_dimension_numbers<[1], [0], [0], [1], [0, 0, 1, 1], [], []>} : vector<34x128xf32>, vector<128x512xf32>, vector<34x512xf32> -> vector<34x512xf32>
    %15 = arith.mulf %12, %14 : vector<34x512xf32>
    %cst_7 = arith.constant dense<0.000000e+00> : vector<512xf32>
    %16 = vector.multi_reduction <add>, %15, %cst_7 [0] : vector<34x512xf32> to vector<512xf32>
    %17 = vector.shape_cast %16 : vector<512xf32> to vector<1x512xf32>
    %c0_8 = arith.constant 0 : index
    %c0_9 = arith.constant 0 : index
    %18 = vector.load %arg4[%c0_8, %c0_9] : memref<1x512xf32, #tpu.memory_space<vmem>>, vector<1x512xf32>
    %19 = math.log %18 : vector<1x512xf32>
    %20 = arith.subf %17, %19 : vector<1x512xf32>
    %cst_10 = arith.constant 2.000000e+00 : f32
    %21 = vector.broadcast %cst_10 : f32 to vector<1x512xf32>
    %22 = arith.cmpf olt, %18, %21 : vector<1x512xf32>
    %cst_11 = arith.constant 2.000000e+00 : f32
    %23 = vector.broadcast %cst_11 : f32 to vector<1x512xf32>
    %24 = arith.divf %18, %23 : vector<1x512xf32>
    %cst_12 = arith.constant 7.500000e-01 : f32
    %25 = vector.broadcast %cst_12 : f32 to vector<1x512xf32>
    %26 = math.powf %24, %25 : vector<1x512xf32>
    %cst_13 = arith.constant 1.000000e+00 : f32
    %27 = vector.broadcast %cst_13 : f32 to vector<1x512xf32>
    %28 = arith.select %22, %26, %27 : vector<1x512xi1>, vector<1x512xf32>
    %29 = arith.mulf %20, %20 : vector<1x512xf32>
    %30 = arith.mulf %29, %28 : vector<1x512xf32>
    %c512_i32 = arith.constant 512 : i32
    %31 = arith.muli %arg0, %c512_i32 : i32
    %32 = tpu.iota {dimensions = array<i32: 1>} : vector<1x512xi32>
    %33 = vector.broadcast %31 : i32 to vector<1x512xi32>
    %34 = arith.addi %33, %32 : vector<1x512xi32>
    %c1000_i32 = arith.constant 1000 : i32
    %35 = vector.broadcast %c1000_i32 : i32 to vector<1x512xi32>
    %36 = arith.cmpi slt, %34, %35 : vector<1x512xi32>
    %cst_14 = arith.constant 0.000000e+00 : f32
    %37 = vector.broadcast %cst_14 : f32 to vector<1x512xf32>
    %38 = arith.select %36, %30, %37 : vector<1x512xi1>, vector<1x512xf32>
    %39 = vector.shape_cast %38 : vector<1x512xf32> to vector<1x1x512xf32>
    %cst_15 = arith.constant dense<0.000000e+00> : vector<1xf32>
    %40 = vector.multi_reduction <add>, %39, %cst_15 [1, 2] : vector<1x1x512xf32> to vector<1xf32>
    %41 = vector.shape_cast %40 : vector<1xf32> to vector<1x1x1xf32>
    %42 = vector.extract %41[0, 0, 0] : f32 from vector<1x1x1xf32>
    %43 = vector.broadcast %42 : f32 to vector<1x1xf32>
    %44 = tpu.iota {dimensions = array<i32: 1>} : vector<1x128xi32>
    %c0_i32 = arith.constant 0 : i32
    %45 = vector.broadcast %c0_i32 : i32 to vector<1x128xi32>
    %46 = arith.cmpi eq, %44, %45 : vector<1x128xi32>
    %cst_16 = arith.constant 0.000000e+00 : f32
    %47 = vector.shape_cast %43 : vector<1x1xf32> to vector<1x1xf32>
    %48 = vector.broadcast %47 : vector<1x1xf32> to vector<1x128xf32>
    %49 = vector.broadcast %cst_16 : f32 to vector<1x128xf32>
    %50 = arith.select %46, %48, %49 : vector<1x128xi1>, vector<1x128xf32>
    %c0_17 = arith.constant 0 : index
    %c0_18 = arith.constant 0 : index
    %51 = vector.load %arg5[%c0_17, %c0_18] : memref<1x128xf32, #tpu.memory_space<vmem>>, vector<1x128xf32>
    tpu.vector_store %arg5[%c0_17, %c0_18], %50 {strides = array<i32>} : memref<1x128xf32, #tpu.memory_space<vmem>>, vector<1x128xf32>,
    return
  }
  func.func @transform_0(%arg0: i32) -> (i32, i32) {
    %c0_i32 = arith.constant 0 : i32
    %c0_i32_0 = arith.constant 0 : i32
    %c0_i32_1 = arith.constant 0 : i32
    return %c0_i32, %c0_i32_0 : i32, i32
  }
  func.func @transform_1(%arg0: i32) -> (i32, i32) {
    %c0_i32 = arith.constant 0 : i32
    %c0_i32_0 = arith.constant 0 : i32
    %c0_i32_1 = arith.constant 0 : i32
    return %c0_i32, %c0_i32_0 : i32, i32
  }
  func.func @transform_2(%arg0: i32) -> (i32, i32) {
    %c0_i32 = arith.constant 0 : i32
    %c0_i32_0 = arith.constant 0 : i32
    return %c0_i32, %arg0 : i32, i32
  }
  func.func @transform_3(%arg0: i32) -> (i32, i32) {
    %c0_i32 = arith.constant 0 : i32
    %c0_i32_0 = arith.constant 0 : i32
    return %c0_i32, %arg0 : i32, i32
  }
  func.func @transform_4(%arg0: i32) -> (i32, i32) {
    %c0_i32 = arith.constant 0 : i32
    %c0_i32_0 = arith.constant 0 : i32
    return %c0_i32, %arg0 : i32, i32
  }
}

</mosaic_0001>

<llo_original>
// kernel: glove_loss.1
$region0: #{glove_loss.1}
  #allocation0 [shape = 'u32[]', space=smem, size = 0x4, offset = 0x4, fixed_abs, tag = 'smem constant byte address 0x4 - core index']
  #allocation1 [shape = 'u32[72,128]{1,0:T(1,128)}', space=vmem, size = 0x9000, scoped, tag = 'internal scratch']
  %s0 = inlined_call_operand.vmem [shape: f32[34,128], index: 0, kind: input, shape index: {}]
  %s1 = inlined_call_operand.vmem [shape: f32[34,128], index: 1, kind: input, shape index: {}]
  %s2 = inlined_call_operand.vmem [shape: s32[2,1024], index: 2, kind: input, shape index: {}]
  %s3 = inlined_call_operand.vmem [shape: f32[1,1024], index: 3, kind: input, shape index: {}]
  %s4 = inlined_call_operand.vmem [shape: f32[1,256], index: 4, kind: output, shape index: {}]
  %s5 = sld [smem:[#allocation0]]
  $region49: #{glove_loss.1} parent=0
    _
  %s7 = ssub.s32 1, %s5
  %s8 = scalar_select 0, %s7, %s5
  loop: start=0, step=1, limit=4
  $region2: #{glove_loss.1} parent=0 // loop_pre_header
    _
  $region3: #{glove_loss.1} parent=0 // loop_header
    %s10 = sphi 0, %s14
    %p11 = scmp.ge.s32.totalorder %s10, 4
    %s18 = sphi 0, %s18
    %s20 = sphi 0, %s18
    %s21 = sphi 0, %s20
    %s35 = sphi 0, %s21
    %s39 = sphi 0, %s39
    %s41 = sphi 0, %s39
    %s42 = sphi 0, %s41
    %s56 = sphi 0, %s42
    %s62 = sphi 0, %s64
    %s65 = sphi 0, %s62
    %s66 = sphi 0, %s65
    %s82 = sphi 0, %s66
    %s88 = sphi 0, %s90
    %s91 = sphi 0, %s88
    %s92 = sphi 0, %s91
    %s108 = sphi 0, %s92
    %s114 = sphi 0, %s116
    %s117 = sphi 0, %s114
    %s118 = sphi 0, %s117
    %s134 = sphi 0, %s118
  $region4: #{glove_loss.1} parent=0 // loop_header_branch
    %13 = sbr.rel (%p11) target = $region8
  $region5: #{glove_loss.1} parent=0 // loop_body
    %s15 = ssub.s32 %s10, 1
    %s16 = ssub.s32 %s10, 2
    %s17 = sadd.s32 %s10, 1
    %s19 = sadd.s32 %s18, 1
    %p22 = scmp.eq.s32.totalorder %s10, 1
    %p23 = scmp.ne.s32.totalorder %s18, %s20
    %p24 = scmp.eq.s32.totalorder %s10, 0
    %p25 = por %p23, %p24
    %p26 = scmp.ne.s32.totalorder %s18, %s20
    %p27 = scmp.eq.s32.totalorder %s15, 1
    %p28 = por %p26, %p27
    %p29 = scmp.ne.s32.totalorder %s20, %s21
    %p30 = scmp.eq.s32.totalorder %s15, 0
    %p31 = por %p29, %p30
    %p32 = scmp.ne.s32.totalorder %s20, %s21
    %p33 = scmp.eq.s32.totalorder %s16, 1
    %p34 = por %p32, %p33
    %p36 = scmp.ne.s32.totalorder %s21, %s35
    %p37 = scmp.eq.s32.totalorder %s16, 0
    %p38 = por %p36, %p37
    %s40 = sadd.s32 %s39, 1
    %p43 = scmp.eq.s32.totalorder %s10, 1
    %p44 = scmp.ne.s32.totalorder %s39, %s41
    %p45 = scmp.eq.s32.totalorder %s10, 0
    %p46 = por %p44, %p45
    %p47 = scmp.ne.s32.totalorder %s39, %s41
    %p48 = scmp.eq.s32.totalorder %s15, 1
    %p49 = por %p47, %p48
    %p50 = scmp.ne.s32.totalorder %s41, %s42
    %p51 = scmp.eq.s32.totalorder %s15, 0
    %p52 = por %p50, %p51
    %p53 = scmp.ne.s32.totalorder %s41, %s42
    %p54 = scmp.eq.s32.totalorder %s16, 1
    %p55 = por %p53, %p54
    %p57 = scmp.ne.s32.totalorder %s42, %s56
    %p58 = scmp.eq.s32.totalorder %s16, 0
    %p59 = por %p57, %p58
    %s60 = ssub.s32 %s10, %s17
    %p61 = scmp.eq.s32.totalorder %s60, 0
    %s63 = sadd.s32 %s62, 1
    %s64 = scalar_select %p61, %s62, %s63
    %p67 = pneg %p61
    %p68 = scmp.eq.s32.totalorder %s10, 1
    %p69 = por %p67, %p68
    %p70 = scmp.ne.s32.totalorder %s62, %s65
    %p71 = scmp.eq.s32.totalorder %s10, 0
    %p72 = por %p70, %p71
    %p73 = scmp.ne.s32.totalorder %s62, %s65
    %p74 = scmp.eq.s32.totalorder %s15, 1
    %p75 = por %p73, %p74
    %p76 = scmp.ne.s32.totalorder %s65, %s66
    %p77 = scmp.eq.s32.totalorder %s15, 0
    %p78 = por %p76, %p77
    %p79 = scmp.ne.s32.totalorder %s65, %s66
    %p80 = scmp.eq.s32.totalorder %s16, 1
    %p81 = por %p79, %p80
    %p83 = scmp.ne.s32.totalorder %s66, %s82
    %p84 = scmp.eq.s32.totalorder %s16, 0
    %p85 = por %p83, %p84
    %s86 = ssub.s32 %s10, %s17
    %p87 = scmp.eq.s32.totalorder %s86, 0
    %s89 = sadd.s32 %s88, 1
    %s90 = scalar_select %p87, %s88, %s89
    %p93 = pneg %p87
    %p94 = scmp.eq.s32.totalorder %s10, 1
    %p95 = por %p93, %p94
    %p96 = scmp.ne.s32.totalorder %s88, %s91
    %p97 = scmp.eq.s32.totalorder %s10, 0
    %p98 = por %p96, %p97
    %p99 = scmp.ne.s32.totalorder %s88, %s91
    %p100 = scmp.eq.s32.totalorder %s15, 1
    %p101 = por %p99, %p100
    %p102 = scmp.ne.s32.totalorder %s91, %s92
    %p103 = scmp.eq.s32.totalorder %s15, 0
    %p104 = por %p102, %p103
    %p105 = scmp.ne.s32.totalorder %s91, %s92
    %p106 = scmp.eq.s32.totalorder %s16, 1
    %p107 = por %p105, %p106
    %p109 = scmp.ne.s32.totalorder %s92, %s108
    %p110 = scmp.eq.s32.totalorder %s16, 0
    %p111 = por %p109, %p110
    %s112 = ssub.s32 %s10, %s17
    %p113 = scmp.eq.s32.totalorder %s112, 0
    %s115 = sadd.s32 %s114, 1
    %s116 = scalar_select %p113, %s114, %s115
    %p119 = pneg %p113
    %p120 = scmp.eq.s32.totalorder %s10, 1
    %p121 = por %p119, %p120
    %p122 = scmp.ne.s32.totalorder %s114, %s117
    %p123 = scmp.eq.s32.totalorder %s10, 0
    %p124 = por %p122, %p123
    %p125 = scmp.ne.s32.totalorder %s114, %s117
    %p126 = scmp.eq.s32.totalorder %s15, 1
    %p127 = por %p125, %p126
    %p128 = scmp.ne.s32.totalorder %s117, %s118
    %p129 = scmp.eq.s32.totalorder %s15, 0
    %p130 = por %p128, %p129
    %p131 = scmp.ne.s32.totalorder %s117, %s118
    %p132 = scmp.eq.s32.totalorder %s16, 1
    %p133 = por %p131, %p132
    %p135 = scmp.ne.s32.totalorder %s118, %s134
    %p136 = scmp.eq.s32.totalorder %s16, 0
    %p137 = por %p135, %p136
    %p138 = scmp.le.s32.totalorder 1, %s10
    %p139 = scmp.lt.s32.totalorder %s10, 3
    %p140 = pnand %p138, %p139
    %p141 = pneg %p140
    // Predicated region
    $region9: #{glove_loss.1} parent=5 // pred_check
      _
    $region10: #{glove_loss.1} parent=5 // pred_check_branch
      %143 = sbr.rel (%p140) target = $region12
    $region11: #{glove_loss.1} parent=5 // pred_region
      %s144 = ssub.s32 %s10, 1
      // Predicated region
      $region13: #{glove_loss.1} parent=11 // pred_check
        %p145 = pneg %p31
      $region14: #{glove_loss.1} parent=11 // pred_check_branch
        %147 = sbr.rel (%p145) target = $region16
      $region15: #{glove_loss.1} parent=11 // pred_region
        _
      $region16: #{glove_loss.1} parent=11 // pred_fallthru
        _
      // Predicated region
      $region17: #{glove_loss.1} parent=11 // pred_check
        %p148 = pneg %p52
      $region18: #{glove_loss.1} parent=11 // pred_check_branch
        %150 = sbr.rel (%p148) target = $region20
      $region19: #{glove_loss.1} parent=11 // pred_region
        _
      $region20: #{glove_loss.1} parent=11 // pred_fallthru
        _
    $region12: #{glove_loss.1} parent=5 // pred_fallthru
      _
    %p151 = scmp.lt.s32.totalorder %s10, 2
    // Predicated region
    $region21: #{glove_loss.1} parent=5 // pred_check
      %p152 = pneg %p151
    $region22: #{glove_loss.1} parent=5 // pred_check_branch
      %154 = sbr.rel (%p152) target = $region24
    $region23: #{glove_loss.1} parent=5 // pred_region
      // Predicated region
      $region25: #{glove_loss.1} parent=23 // pred_check
        %p155 = pneg %p72
      $region26: #{glove_loss.1} parent=23 // pred_check_branch
        %157 = sbr.rel (%p155) target = $region28
      $region27: #{glove_loss.1} parent=23 // pred_region
        %s158 = smul.u32 4, %s10
        %p159 = scmp.lt.s32.totalorder %s158, 7
        %s160 = scalar_select %p159, %s158, 7
        %s161 = smul.addr %s160, 2
        %s162 = scalar_lea.vmem %s2, %s161
        %s163 = smul.u32 4, %s10
      $region28: #{glove_loss.1} parent=23 // pred_fallthru
        _
      // Predicated region
      $region29: #{glove_loss.1} parent=23 // pred_check
        %p164 = pneg %p98
      $region30: #{glove_loss.1} parent=23 // pred_check_branch
        %166 = sbr.rel (%p164) target = $region32
      $region31: #{glove_loss.1} parent=23 // pred_region
        %s167 = smul.u32 4, %s10
        %p168 = scmp.lt.s32.totalorder %s167, 7
        %s169 = scalar_select %p168, %s167, 7
        %s170 = scalar_lea.vmem %s3, %s169
        %s171 = smul.u32 4, %s10
      $region32: #{glove_loss.1} parent=23 // pred_fallthru
        _
    $region24: #{glove_loss.1} parent=5 // pred_fallthru
      _
    %p172 = scmp.le.s32.totalorder 1, %s10
    %p173 = scmp.lt.s32.totalorder %s10, 3
    %p174 = pnand %p172, %p173
    %p175 = pneg %p174
    // Predicated region
    $region33: #{glove_loss.1} parent=5 // pred_check
      _
    $region34: #{glove_loss.1} parent=5 // pred_check_branch
      %177 = sbr.rel (%p174) target = $region36
    $region35: #{glove_loss.1} parent=5 // pred_region
      %s178 = ssub.s32 %s10, 1
      %p179 = pneg %p31
      %p180 = pneg %p28
      %p181 = pneg %p52
      %p182 = pneg %p49
      %s183 = smul.u32 4, %s15
      %p184 = scmp.lt.s32.totalorder %s183, 7
      %s185 = scalar_select %p184, %s183, 7
      %s186 = smul.addr %s185, 2
      %s187 = scalar_lea.vmem %s2, %s186
      %p188 = pneg %p78
      %p189 = pneg %p75
      %s190 = smul.u32 4, %s15
      %p191 = scmp.lt.s32.totalorder %s190, 7
      %s192 = scalar_select %p191, %s190, 7
      %s193 = scalar_lea.vmem %s3, %s192
      %p194 = pneg %p104
      %p195 = pneg %p101
      %p196 = pneg %p130
      %p197 = pneg %p127
      %p198 = scmp.lt.s32.totalorder %s15, 1
      %s199 = scalar_select %p198, %s15, 1
      %s200 = scalar_lea.vmem %s4, %s199
      %s201 = smul.u32 4, %s15
      %p202 = scmp.lt.s32.totalorder %s201, 7
      %s203 = scalar_select %p202, %s201, 7
      %s204 = smul.addr %s203, 2
      %s205 = scalar_lea.vmem %s2, %s204
      %s206 = smul.u32 4, %s15
      %s207 = smul.u32 4, %s15
      %p208 = scmp.lt.s32.totalorder %s207, 7
      %s209 = scalar_select %p208, %s207, 7
      %s210 = scalar_lea.vmem %s3, %s209
      %s211 = smul.u32 4, %s15
      %p212 = scmp.lt.s32.totalorder %s15, 1
      %s213 = scalar_select %p212, %s15, 1
      %s214 = scalar_lea.vmem %s4, %s213
      %v215 = vld [vmem:[%s205] ss:$2 sm:$0xf]
      %s216 = scalar_lea.vmem %s205, 1
      %v217 = vld [vmem:[%s216] ss:$2 sm:$0xf]
      %v218 = vlaneseq
      %v219 = vshrl.u32 %v218, 7
      %v220 = vadd.s32 %v219, 8
      %v221 = vadd.s32 %v219, 16
      %v222 = vadd.s32 %v219, 24
      %v223 = vadd.s32 %v219, 32
      %v224 = vadd.s32 %v219, 40
      %v225 = vadd.s32 %v219, 48
      %v226 = vadd.s32 %v219, 56
      %v227 = vadd.s32 %v219, 64
      %v228 = vadd.s32 %v219, 72
      %v229 = vadd.s32 %v219, 80
      %v230 = vadd.s32 %v219, 88
      %v231 = vadd.s32 %v219, 96
      %v232 = vadd.s32 %v219, 104
      %v233 = vadd.s32 %v219, 112
      %v234 = vadd.s32 %v219, 120
      %v235 = vperm.slane %v215, 0
      %v236 = vperm.slane %v215, 1
      %v237 = vperm.slane %v215, 2
      %v238 = vperm.slane %v215, 3
      %vm239 = vcmp.eq.s32.totalorder %v219, %v235
      %vm240 = vcmp.eq.s32.totalorder %v219, %v236
      %vm241 = vcmp.eq.s32.totalorder %v219, %v237
      %vm242 = vcmp.eq.s32.totalorder %v219, %v238
      %vm243 = vcmp.eq.s32.totalorder %v220, %v235
      %vm244 = vcmp.eq.s32.totalorder %v220, %v236
      %vm245 = vcmp.eq.s32.totalorder %v220, %v237
      %vm246 = vcmp.eq.s32.totalorder %v220, %v238
      %vm247 = vcmp.eq.s32.totalorder %v221, %v235
      %vm248 = vcmp.eq.s32.totalorder %v221, %v236
      %vm249 = vcmp.eq.s32.totalorder %v221, %v237
      %vm250 = vcmp.eq.s32.totalorder %v221, %v238
      %vm251 = vcmp.eq.s32.totalorder %v222, %v235
      %vm252 = vcmp.eq.s32.totalorder %v222, %v236
      %vm253 = vcmp.eq.s32.totalorder %v222, %v237
      %vm254 = vcmp.eq.s32.totalorder %v222, %v238
      %vm255 = vcmp.eq.s32.totalorder %v223, %v235
      %vm256 = vcmp.eq.s32.totalorder %v223, %v236
      %vm257 = vcmp.eq.s32.totalorder %v223, %v237
      %vm258 = vcmp.eq.s32.totalorder %v223, %v238
      %vm259 = vcmp.eq.s32.totalorder %v224, %v235
      %vm260 = vcmp.eq.s32.totalorder %v224, %v236
      %vm261 = vcmp.eq.s32.totalorder %v224, %v237
      %vm262 = vcmp.eq.s32.totalorder %v224, %v238
      %vm263 = vcmp.eq.s32.totalorder %v225, %v235
      %vm264 = vcmp.eq.s32.totalorder %v225, %v236
      %vm265 = vcmp.eq.s32.totalorder %v225, %v237
      %vm266 = vcmp.eq.s32.totalorder %v225, %v238
      %vm267 = vcmp.eq.s32.totalorder %v226, %v235
      %vm268 = vcmp.eq.s32.totalorder %v226, %v236
      %vm269 = vcmp.eq.s32.totalorder %v226, %v237
      %vm270 = vcmp.eq.s32.totalorder %v226, %v238
      %vm271 = vcmp.eq.s32.totalorder %v227, %v235
      %vm272 = vcmp.eq.s32.totalorder %v227, %v236
      %vm273 = vcmp.eq.s32.totalorder %v227, %v237
      %vm274 = vcmp.eq.s32.totalorder %v227, %v238
      %vm275 = vcmp.eq.s32.totalorder %v228, %v235
      %vm276 = vcmp.eq.s32.totalorder %v228, %v236
      %vm277 = vcmp.eq.s32.totalorder %v228, %v237
      %vm278 = vcmp.eq.s32.totalorder %v228, %v238
      %vm279 = vcmp.eq.s32.totalorder %v229, %v235
      %vm280 = vcmp.eq.s32.totalorder %v229, %v236
      %vm281 = vcmp.eq.s32.totalorder %v229, %v237
      %vm282 = vcmp.eq.s32.totalorder %v229, %v238
      %vm283 = vcmp.eq.s32.totalorder %v230, %v235
      %vm284 = vcmp.eq.s32.totalorder %v230, %v236
      %vm285 = vcmp.eq.s32.totalorder %v230, %v237
      %vm286 = vcmp.eq.s32.totalorder %v230, %v238
      %vm287 = vcmp.eq.s32.totalorder %v231, %v235
      %vm288 = vcmp.eq.s32.totalorder %v231, %v236
      %vm289 = vcmp.eq.s32.totalorder %v231, %v237
      %vm290 = vcmp.eq.s32.totalorder %v231, %v238
      %vm291 = vcmp.eq.s32.totalorder %v232, %v235
      %vm292 = vcmp.eq.s32.totalorder %v232, %v236
      %vm293 = vcmp.eq.s32.totalorder %v232, %v237
      %vm294 = vcmp.eq.s32.totalorder %v232, %v238
      %vm295 = vcmp.eq.s32.totalorder %v233, %v235
      %vm296 = vcmp.eq.s32.totalorder %v233, %v236
      %vm297 = vcmp.eq.s32.totalorder %v233, %v237
      %vm298 = vcmp.eq.s32.totalorder %v233, %v238
      %vm299 = vcmp.eq.s32.totalorder %v234, %v235
      %vm300 = vcmp.eq.s32.totalorder %v234, %v236
      %vm301 = vcmp.eq.s32.totalorder %v234, %v237
      %vm302 = vcmp.eq.s32.totalorder %v234, %v238
      %v303 = vsel %vm239, 1, 0
      %v304 = vsel %vm240, 1, 0
      %v305 = vsel %vm241, 1, 0
      %v306 = vsel %vm242, 1, 0
      %v307 = vsel %vm243, 1, 0
      %v308 = vsel %vm244, 1, 0
      %v309 = vsel %vm245, 1, 0
      %v310 = vsel %vm246, 1, 0
      %v311 = vsel %vm247, 1, 0
      %v312 = vsel %vm248, 1, 0
      %v313 = vsel %vm249, 1, 0
      %v314 = vsel %vm250, 1, 0
      %v315 = vsel %vm251, 1, 0
      %v316 = vsel %vm252, 1, 0
      %v317 = vsel %vm253, 1, 0
      %v318 = vsel %vm254, 1, 0
      %v319 = vsel %vm255, 1, 0
      %v320 = vsel %vm256, 1, 0
      %v321 = vsel %vm257, 1, 0
      %v322 = vsel %vm258, 1, 0
      %v323 = vsel %vm259, 1, 0
      %v324 = vsel %vm260, 1, 0
      %v325 = vsel %vm261, 1, 0
      %v326 = vsel %vm262, 1, 0
      %v327 = vsel %vm263, 1, 0
      %v328 = vsel %vm264, 1, 0
      %v329 = vsel %vm265, 1, 0
      %v330 = vsel %vm266, 1, 0
      %v331 = vsel %vm267, 1, 0
      %v332 = vsel %vm268, 1, 0
      %v333 = vsel %vm269, 1, 0
      %v334 = vsel %vm270, 1, 0
      %v335 = vsel %vm271, 1, 0
      %v336 = vsel %vm272, 1, 0
      %v337 = vsel %vm273, 1, 0
      %v338 = vsel %vm274, 1, 0
      %v339 = vsel %vm275, 1, 0
      %v340 = vsel %vm276, 1, 0
      %v341 = vsel %vm277, 1, 0
      %v342 = vsel %vm278, 1, 0
      %v343 = vsel %vm279, 1, 0
      %v344 = vsel %vm280, 1, 0
      %v345 = vsel %vm281, 1, 0
      %v346 = vsel %vm282, 1, 0
      %v347 = vsel %vm283, 1, 0
      %v348 = vsel %vm284, 1, 0
      %v349 = vsel %vm285, 1, 0
      %v350 = vsel %vm286, 1, 0
      %v351 = vsel %vm287, 1, 0
      %v352 = vsel %vm288, 1, 0
      %v353 = vsel %vm289, 1, 0
      %v354 = vsel %vm290, 1, 0
      %v355 = vsel %vm291, 1, 0
      %v356 = vsel %vm292, 1, 0
      %v357 = vsel %vm293, 1, 0
      %v358 = vsel %vm294, 1, 0
      %v359 = vsel %vm295, 1, 0
      %v360 = vsel %vm296, 1, 0
      %v361 = vsel %vm297, 1, 0
      %v362 = vsel %vm298, 1, 0
      %v363 = vsel %vm299, 1, 0
      %v364 = vsel %vm300, 1, 0
      %v365 = vsel %vm301, 1, 0
      %v366 = vsel %vm302, 1, 0
      %v367 = vcvt.s32.f32 %v303
      %v368 = vcvt.s32.f32 %v304
      %v369 = vcvt.s32.f32 %v305
      %v370 = vcvt.s32.f32 %v306
      %v371 = vcvt.s32.f32 %v307
      %v372 = vcvt.s32.f32 %v308
      %v373 = vcvt.s32.f32 %v309
      %v374 = vcvt.s32.f32 %v310
      %v375 = vcvt.s32.f32 %v311
      %v376 = vcvt.s32.f32 %v312
      %v377 = vcvt.s32.f32 %v313
      %v378 = vcvt.s32.f32 %v314
      %v379 = vcvt.s32.f32 %v315
      %v380 = vcvt.s32.f32 %v316
      %v381 = vcvt.s32.f32 %v317
      %v382 = vcvt.s32.f32 %v318
      %v383 = vcvt.s32.f32 %v319
      %v384 = vcvt.s32.f32 %v320
      %v385 = vcvt.s32.f32 %v321
      %v386 = vcvt.s32.f32 %v322
      %v387 = vcvt.s32.f32 %v323
      %v388 = vcvt.s32.f32 %v324
      %v389 = vcvt.s32.f32 %v325
      %v390 = vcvt.s32.f32 %v326
      %v391 = vcvt.s32.f32 %v327
      %v392 = vcvt.s32.f32 %v328
      %v393 = vcvt.s32.f32 %v329
      %v394 = vcvt.s32.f32 %v330
      %v395 = vcvt.s32.f32 %v331
      %v396 = vcvt.s32.f32 %v332
      %v397 = vcvt.s32.f32 %v333
      %v398 = vcvt.s32.f32 %v334
      %v399 = vcvt.s32.f32 %v335
      %v400 = vcvt.s32.f32 %v336
      %v401 = vcvt.s32.f32 %v337
      %v402 = vcvt.s32.f32 %v338
      %v403 = vcvt.s32.f32 %v339
      %v404 = vcvt.s32.f32 %v340
      %v405 = vcvt.s32.f32 %v341
      %v406 = vcvt.s32.f32 %v342
      %v407 = vcvt.s32.f32 %v343
      %v408 = vcvt.s32.f32 %v344
      %v409 = vcvt.s32.f32 %v345
      %v410 = vcvt.s32.f32 %v346
      %v411 = vcvt.s32.f32 %v347
      %v412 = vcvt.s32.f32 %v348
      %v413 = vcvt.s32.f32 %v349
      %v414 = vcvt.s32.f32 %v350
      %v415 = vcvt.s32.f32 %v351
      %v416 = vcvt.s32.f32 %v352
      %v417 = vcvt.s32.f32 %v353
      %v418 = vcvt.s32.f32 %v354
      %v419 = vcvt.s32.f32 %v355
      %v420 = vcvt.s32.f32 %v356
      %v421 = vcvt.s32.f32 %v357
      %v422 = vcvt.s32.f32 %v358
      %v423 = vcvt.s32.f32 %v359
      %v424 = vcvt.s32.f32 %v360
      %v425 = vcvt.s32.f32 %v361
      %v426 = vcvt.s32.f32 %v362
      %v427 = vcvt.s32.f32 %v363
      %v428 = vcvt.s32.f32 %v364
      %v429 = vcvt.s32.f32 %v365
      %v430 = vcvt.s32.f32 %v366
      %v431 = vperm.slane %v217, 0
      %v432 = vperm.slane %v217, 1
      %v433 = vperm.slane %v217, 2
      %v434 = vperm.slane %v217, 3
      %vm435 = vcmp.eq.s32.totalorder %v219, %v431
      %vm436 = vcmp.eq.s32.totalorder %v219, %v432
      %vm437 = vcmp.eq.s32.totalorder %v219, %v433
      %vm438 = vcmp.eq.s32.totalorder %v219, %v434
      %vm439 = vcmp.eq.s32.totalorder %v220, %v431
      %vm440 = vcmp.eq.s32.totalorder %v220, %v432
      %vm441 = vcmp.eq.s32.totalorder %v220, %v433
      %vm442 = vcmp.eq.s32.totalorder %v220, %v434
      %vm443 = vcmp.eq.s32.totalorder %v221, %v431
      %vm444 = vcmp.eq.s32.totalorder %v221, %v432
      %vm445 = vcmp.eq.s32.totalorder %v221, %v433
      %vm446 = vcmp.eq.s32.totalorder %v221, %v434
      %vm447 = vcmp.eq.s32.totalorder %v222, %v431
      %vm448 = vcmp.eq.s32.totalorder %v222, %v432
      %vm449 = vcmp.eq.s32.totalorder %v222, %v433
      %vm450 = vcmp.eq.s32.totalorder %v222, %v434
      %vm451 = vcmp.eq.s32.totalorder %v223, %v431
      %vm452 = vcmp.eq.s32.totalorder %v223, %v432
      %vm453 = vcmp.eq.s32.totalorder %v223, %v433
      %vm454 = vcmp.eq.s32.totalorder %v223, %v434
      %vm455 = vcmp.eq.s32.totalorder %v224, %v431
      %vm456 = vcmp.eq.s32.totalorder %v224, %v432
      %vm457 = vcmp.eq.s32.totalorder %v224, %v433
      %vm458 = vcmp.eq.s32.totalorder %v224, %v434
      %vm459 = vcmp.eq.s32.totalorder %v225, %v431
      %vm460 = vcmp.eq.s32.totalorder %v225, %v432
      %vm461 = vcmp.eq.s32.totalorder %v225, %v433
      %vm462 = vcmp.eq.s32.totalorder %v225, %v434
      %vm463 = vcmp.eq.s32.totalorder %v226, %v431
      %vm464 = vcmp.eq.s32.totalorder %v226, %v432
      %vm465 = vcmp.eq.s32.totalorder %v226, %v433
      %vm466 = vcmp.eq.s32.totalorder %v226, %v434
      %vm467 = vcmp.eq.s32.totalorder %v227, %v431
      %vm468 = vcmp.eq.s32.totalorder %v227, %v432
      %vm469 = vcmp.eq.s32.totalorder %v227, %v433
      %vm470 = vcmp.eq.s32.totalorder %v227, %v434
      %vm471 = vcmp.eq.s32.totalorder %v228, %v431
      %vm472 = vcmp.eq.s32.totalorder %v228, %v432
      %vm473 = vcmp.eq.s32.totalorder %v228, %v433
      %vm474 = vcmp.eq.s32.totalorder %v228, %v434
      %vm475 = vcmp.eq.s32.totalorder %v229, %v431
      %vm476 = vcmp.eq.s32.totalorder %v229, %v432
      %vm477 = vcmp.eq.s32.totalorder %v229, %v433
      %vm478 = vcmp.eq.s32.totalorder %v229, %v434
      %vm479 = vcmp.eq.s32.totalorder %v230, %v431
      %vm480 = vcmp.eq.s32.totalorder %v230, %v432
      %vm481 = vcmp.eq.s32.totalorder %v230, %v433
      %vm482 = vcmp.eq.s32.totalorder %v230, %v434
      %vm483 = vcmp.eq.s32.totalorder %v231, %v431
      %vm484 = vcmp.eq.s32.totalorder %v231, %v432
      %vm485 = vcmp.eq.s32.totalorder %v231, %v433
      %vm486 = vcmp.eq.s32.totalorder %v231, %v434
      %vm487 = vcmp.eq.s32.totalorder %v232, %v431
      %vm488 = vcmp.eq.s32.totalorder %v232, %v432
      %vm489 = vcmp.eq.s32.totalorder %v232, %v433
      %vm490 = vcmp.eq.s32.totalorder %v232, %v434
      %vm491 = vcmp.eq.s32.totalorder %v233, %v431
      %vm492 = vcmp.eq.s32.totalorder %v233, %v432
      %vm493 = vcmp.eq.s32.totalorder %v233, %v433
      %vm494 = vcmp.eq.s32.totalorder %v233, %v434
      %vm495 = vcmp.eq.s32.totalorder %v234, %v431
      %vm496 = vcmp.eq.s32.totalorder %v234, %v432
      %vm497 = vcmp.eq.s32.totalorder %v234, %v433
      %vm498 = vcmp.eq.s32.totalorder %v234, %v434
      %v499 = vsel %vm435, 1, 0
      %v500 = vsel %vm436, 1, 0
      %v501 = vsel %vm437, 1, 0
      %v502 = vsel %vm438, 1, 0
      %v503 = vsel %vm439, 1, 0
      %v504 = vsel %vm440, 1, 0
      %v505 = vsel %vm441, 1, 0
      %v506 = vsel %vm442, 1, 0
      %v507 = vsel %vm443, 1, 0
      %v508 = vsel %vm444, 1, 0
      %v509 = vsel %vm445, 1, 0
      %v510 = vsel %vm446, 1, 0
      %v511 = vsel %vm447, 1, 0
      %v512 = vsel %vm448, 1, 0
      %v513 = vsel %vm449, 1, 0
      %v514 = vsel %vm450, 1, 0
      %v515 = vsel %vm451, 1, 0
      %v516 = vsel %vm452, 1, 0
      %v517 = vsel %vm453, 1, 0
      %v518 = vsel %vm454, 1, 0
      %v519 = vsel %vm455, 1, 0
      %v520 = vsel %vm456, 1, 0
      %v521 = vsel %vm457, 1, 0
      %v522 = vsel %vm458, 1, 0
      %v523 = vsel %vm459, 1, 0
      %v524 = vsel %vm460, 1, 0
      %v525 = vsel %vm461, 1, 0
      %v526 = vsel %vm462, 1, 0
      %v527 = vsel %vm463, 1, 0
      %v528 = vsel %vm464, 1, 0
      %v529 = vsel %vm465, 1, 0
      %v530 = vsel %vm466, 1, 0
      %v531 = vsel %vm467, 1, 0
      %v532 = vsel %vm468, 1, 0
      %v533 = vsel %vm469, 1, 0
      %v534 = vsel %vm470, 1, 0
      %v535 = vsel %vm471, 1, 0
      %v536 = vsel %vm472, 1, 0
      %v537 = vsel %vm473, 1, 0
      %v538 = vsel %vm474, 1, 0
      %v539 = vsel %vm475, 1, 0
      %v540 = vsel %vm476, 1, 0
      %v541 = vsel %vm477, 1, 0
      %v542 = vsel %vm478, 1, 0
      %v543 = vsel %vm479, 1, 0
      %v544 = vsel %vm480, 1, 0
      %v545 = vsel %vm481, 1, 0
      %v546 = vsel %vm482, 1, 0
      %v547 = vsel %vm483, 1, 0
      %v548 = vsel %vm484, 1, 0
      %v549 = vsel %vm485, 1, 0
      %v550 = vsel %vm486, 1, 0
      %v551 = vsel %vm487, 1, 0
      %v552 = vsel %vm488, 1, 0
      %v553 = vsel %vm489, 1, 0
      %v554 = vsel %vm490, 1, 0
      %v555 = vsel %vm491, 1, 0
      %v556 = vsel %vm492, 1, 0
      %v557 = vsel %vm493, 1, 0
      %v558 = vsel %vm494, 1, 0
      %v559 = vsel %vm495, 1, 0
      %v560 = vsel %vm496, 1, 0
      %v561 = vsel %vm497, 1, 0
      %v562 = vsel %vm498, 1, 0
      %v563 = vcvt.s32.f32 %v499
      %v564 = vcvt.s32.f32 %v500
      %v565 = vcvt.s32.f32 %v501
      %v566 = vcvt.s32.f32 %v502
      %v567 = vcvt.s32.f32 %v503
      %v568 = vcvt.s32.f32 %v504
      %v569 = vcvt.s32.f32 %v505
      %v570 = vcvt.s32.f32 %v506
      %v571 = vcvt.s32.f32 %v507
      %v572 = vcvt.s32.f32 %v508
      %v573 = vcvt.s32.f32 %v509
      %v574 = vcvt.s32.f32 %v510
      %v575 = vcvt.s32.f32 %v511
      %v576 = vcvt.s32.f32 %v512
      %v577 = vcvt.s32.f32 %v513
      %v578 = vcvt.s32.f32 %v514
      %v579 = vcvt.s32.f32 %v515
      %v580 = vcvt.s32.f32 %v516
      %v581 = vcvt.s32.f32 %v517
      %v582 = vcvt.s32.f32 %v518
      %v583 = vcvt.s32.f32 %v519
      %v584 = vcvt.s32.f32 %v520
      %v585 = vcvt.s32.f32 %v521
      %v586 = vcvt.s32.f32 %v522
      %v587 = vcvt.s32.f32 %v523
      %v588 = vcvt.s32.f32 %v524
      %v589 = vcvt.s32.f32 %v525
      %v590 = vcvt.s32.f32 %v526
      %v591 = vcvt.s32.f32 %v527
      %v592 = vcvt.s32.f32 %v528
      %v593 = vcvt.s32.f32 %v529
      %v594 = vcvt.s32.f32 %v530
      %v595 = vcvt.s32.f32 %v531
      %v596 = vcvt.s32.f32 %v532
      %v597 = vcvt.s32.f32 %v533
      %v598 = vcvt.s32.f32 %v534
      %v599 = vcvt.s32.f32 %v535
      %v600 = vcvt.s32.f32 %v536
      %v601 = vcvt.s32.f32 %v537
      %v602 = vcvt.s32.f32 %v538
      %v603 = vcvt.s32.f32 %v539
      %v604 = vcvt.s32.f32 %v540
      %v605 = vcvt.s32.f32 %v541
      %v606 = vcvt.s32.f32 %v542
      %v607 = vcvt.s32.f32 %v543
      %v608 = vcvt.s32.f32 %v544
      %v609 = vcvt.s32.f32 %v545
      %v610 = vcvt.s32.f32 %v546
      %v611 = vcvt.s32.f32 %v547
      %v612 = vcvt.s32.f32 %v548
      %v613 = vcvt.s32.f32 %v549
      %v614 = vcvt.s32.f32 %v550
      %v615 = vcvt.s32.f32 %v551
      %v616 = vcvt.s32.f32 %v552
      %v617 = vcvt.s32.f32 %v553
      %v618 = vcvt.s32.f32 %v554
      %v619 = vcvt.s32.f32 %v555
      %v620 = vcvt.s32.f32 %v556
      %v621 = vcvt.s32.f32 %v557
      %v622 = vcvt.s32.f32 %v558
      %v623 = vcvt.s32.f32 %v559
      %v624 = vcvt.s32.f32 %v560
      %v625 = vcvt.s32.f32 %v561
      %v626 = vcvt.s32.f32 %v562
      %v627 = vld [vmem:[%s0] sm:$0xff]
      %v628 = vld [vmem:[%s0 + $0x8] sm:$0xff]
      %v629 = vld [vmem:[%s0 + $0x10] sm:$0xff]
      %v630 = vld [vmem:[%s0 + $0x18] sm:$0xff]
      %v631 = vld [vmem:[%s0 + $0x20] sm:$0x3]
      %632 = vmatpush.msra.mxu0 %v427
      %633 = vmatpush.msra.mxu0 %v423
      %634 = vmatpush.msra.mxu0 %v419
      %635 = vmatpush.msra.mxu0 %v415
      %636 = vmatpush.msra.mxu0 %v411
      %637 = vmatpush.msra.mxu0 %v407
      %638 = vmatpush.msra.mxu0 %v403
      %639 = vmatpush.msra.mxu0 %v399
      %640 = vmatpush.msra.mxu0 %v395
      %641 = vmatpush.msra.mxu0 %v391
      %642 = vmatpush.msra.mxu0 %v387
      %643 = vmatpush.msra.mxu0 %v383
      %644 = vmatpush.msra.mxu0 %v379
      %645 = vmatpush.msra.mxu0 %v375
      %646 = vmatpush.msra.mxu0 %v371
      %647 = vmatpush.msra.mxu0 %v367
      %648 = vmatmul.f32.gmra.mxu0 %v627
      %v649 = vpop.f32.mrf.mxu0
      %v650 = vadd.f32 0.0, %v649
      %651 = vmatmul.f32.gmra.mxu0 %v628
      %v652 = vpop.f32.mrf.mxu0
      %v653 = vadd.f32 0.0, %v652
      %654 = vmatmul.f32.gmra.mxu0 %v629
      %v655 = vpop.f32.mrf.mxu0
      %v656 = vadd.f32 0.0, %v655
      %657 = vmatmul.f32.gmra.mxu0 %v630
      %v658 = vpop.f32.mrf.mxu0
      %v659 = vadd.f32 0.0, %v658
      %660 = vmatmul.f32.gmra.mxu0 %v631
      %v661 = vpop.f32.mrf.mxu0
      %v662 = vadd.f32 0.0, %v661
      %663 = vdwg.mxu0
      %664 = vmatpush.msra.mxu0 %v428
      %665 = vmatpush.msra.mxu0 %v424
      %666 = vmatpush.msra.mxu0 %v420
      %667 = vmatpush.msra.mxu0 %v416
      %668 = vmatpush.msra.mxu0 %v412
      %669 = vmatpush.msra.mxu0 %v408
      %670 = vmatpush.msra.mxu0 %v404
      %671 = vmatpush.msra.mxu0 %v400
      %672 = vmatpush.msra.mxu0 %v396
      %673 = vmatpush.msra.mxu0 %v392
      %674 = vmatpush.msra.mxu0 %v388
      %675 = vmatpush.msra.mxu0 %v384
      %676 = vmatpush.msra.mxu0 %v380
      %677 = vmatpush.msra.mxu0 %v376
      %678 = vmatpush.msra.mxu0 %v372
      %679 = vmatpush.msra.mxu0 %v368
      %680 = vmatmul.f32.gmra.mxu0 %v627
      %v681 = vpop.f32.mrf.mxu0
      %v682 = vadd.f32 0.0, %v681
      %683 = vmatmul.f32.gmra.mxu0 %v628
      %v684 = vpop.f32.mrf.mxu0
      %v685 = vadd.f32 0.0, %v684
      %686 = vmatmul.f32.gmra.mxu0 %v629
      %v687 = vpop.f32.mrf.mxu0
      %v688 = vadd.f32 0.0, %v687
      %689 = vmatmul.f32.gmra.mxu0 %v630
      %v690 = vpop.f32.mrf.mxu0
      %v691 = vadd.f32 0.0, %v690
      %692 = vmatmul.f32.gmra.mxu0 %v631
      %v693 = vpop.f32.mrf.mxu0
      %v694 = vadd.f32 0.0, %v693
      %695 = vdwg.mxu0
      %696 = vmatpush.msra.mxu0 %v429
      %697 = vmatpush.msra.mxu0 %v425
      %698 = vmatpush.msra.mxu0 %v421
      %699 = vmatpush.msra.mxu0 %v417
      %700 = vmatpush.msra.mxu0 %v413
      %701 = vmatpush.msra.mxu0 %v409
      %702 = vmatpush.msra.mxu0 %v405
      %703 = vmatpush.msra.mxu0 %v401
      %704 = vmatpush.msra.mxu0 %v397
      %705 = vmatpush.msra.mxu0 %v393
      %706 = vmatpush.msra.mxu0 %v389
      %707 = vmatpush.msra.mxu0 %v385
      %708 = vmatpush.msra.mxu0 %v381
      %709 = vmatpush.msra.mxu0 %v377
      %710 = vmatpush.msra.mxu0 %v373
      %711 = vmatpush.msra.mxu0 %v369
      %712 = vmatmul.f32.gmra.mxu0 %v627
      %v713 = vpop.f32.mrf.mxu0
      %v714 = vadd.f32 0.0, %v713
      %715 = vmatmul.f32.gmra.mxu0 %v628
      %v716 = vpop.f32.mrf.mxu0
      %v717 = vadd.f32 0.0, %v716
      %718 = vmatmul.f32.gmra.mxu0 %v629
      %v719 = vpop.f32.mrf.mxu0
      %v720 = vadd.f32 0.0, %v719
      %721 = vmatmul.f32.gmra.mxu0 %v630
      %v722 = vpop.f32.mrf.mxu0
      %v723 = vadd.f32 0.0, %v722
      %724 = vmatmul.f32.gmra.mxu0 %v631
      %v725 = vpop.f32.mrf.mxu0
      %v726 = vadd.f32 0.0, %v725
      %727 = vdwg.mxu0
      %728 = vmatpush.msra.mxu0 %v430
      %729 = vmatpush.msra.mxu0 %v426
      %730 = vmatpush.msra.mxu0 %v422
      %731 = vmatpush.msra.mxu0 %v418
      %732 = vmatpush.msra.mxu0 %v414
      %733 = vmatpush.msra.mxu0 %v410
      %734 = vmatpush.msra.mxu0 %v406
      %735 = vmatpush.msra.mxu0 %v402
      %736 = vmatpush.msra.mxu0 %v398
      %737 = vmatpush.msra.mxu0 %v394
      %738 = vmatpush.msra.mxu0 %v390
      %739 = vmatpush.msra.mxu0 %v386
      %740 = vmatpush.msra.mxu0 %v382
      %741 = vmatpush.msra.mxu0 %v378
      %742 = vmatpush.msra.mxu0 %v374
      %743 = vmatpush.msra.mxu0 %v370
      %744 = vmatmul.f32.gmra.mxu0 %v627
      %v745 = vpop.f32.mrf.mxu0
      %v746 = vadd.f32 0.0, %v745
      %747 = vmatmul.f32.gmra.mxu0 %v628
      %v748 = vpop.f32.mrf.mxu0
      %v749 = vadd.f32 0.0, %v748
      %750 = vmatmul.f32.gmra.mxu0 %v629
      %v751 = vpop.f32.mrf.mxu0
      %v752 = vadd.f32 0.0, %v751
      %753 = vmatmul.f32.gmra.mxu0 %v630
      %v754 = vpop.f32.mrf.mxu0
      %v755 = vadd.f32 0.0, %v754
      %756 = vmatmul.f32.gmra.mxu0 %v631
      %v757 = vpop.f32.mrf.mxu0
      %v758 = vadd.f32 0.0, %v757
      %759 = vdwg.mxu0
      %v760 = vld [vmem:[%s1] sm:$0xff]
      %v761 = vld [vmem:[%s1 + $0x8] sm:$0xff]
      %v762 = vld [vmem:[%s1 + $0x10] sm:$0xff]
      %v763 = vld [vmem:[%s1 + $0x18] sm:$0xff]
      %v764 = vld [vmem:[%s1 + $0x20] sm:$0x3]
      %765 = vmatpush.msra.mxu0 %v623
      %766 = vmatpush.msra.mxu0 %v619
      %767 = vmatpush.msra.mxu0 %v615
      %768 = vmatpush.msra.mxu0 %v611
      %769 = vmatpush.msra.mxu0 %v607
      %770 = vmatpush.msra.mxu0 %v603
      %771 = vmatpush.msra.mxu0 %v599
      %772 = vmatpush.msra.mxu0 %v595
      %773 = vmatpush.msra.mxu0 %v591
      %774 = vmatpush.msra.mxu0 %v587
      %775 = vmatpush.msra.mxu0 %v583
      %776 = vmatpush.msra.mxu0 %v579
      %777 = vmatpush.msra.mxu0 %v575
      %778 = vmatpush.msra.mxu0 %v571
      %779 = vmatpush.msra.mxu0 %v567
      %780 = vmatpush.msra.mxu0 %v563
      %781 = vmatmul.f32.gmra.mxu0 %v760
      %v782 = vpop.f32.mrf.mxu0
      %v783 = vadd.f32 0.0, %v782
      %784 = vmatmul.f32.gmra.mxu0 %v761
      %v785 = vpop.f32.mrf.mxu0
      %v786 = vadd.f32 0.0, %v785
      %787 = vmatmul.f32.gmra.mxu0 %v762
      %v788 = vpop.f32.mrf.mxu0
      %v789 = vadd.f32 0.0, %v788
      %790 = vmatmul.f32.gmra.mxu0 %v763
      %v791 = vpop.f32.mrf.mxu0
      %v792 = vadd.f32 0.0, %v791
      %793 = vmatmul.f32.gmra.mxu0 %v764
      %v794 = vpop.f32.mrf.mxu0
      %v795 = vadd.f32 0.0, %v794
      %796 = vdwg.mxu0
      %797 = vmatpush.msra.mxu0 %v624
      %798 = vmatpush.msra.mxu0 %v620
      %799 = vmatpush.msra.mxu0 %v616
      %800 = vmatpush.msra.mxu0 %v612
      %801 = vmatpush.msra.mxu0 %v608
      %802 = vmatpush.msra.mxu0 %v604
      %803 = vmatpush.msra.mxu0 %v600
      %804 = vmatpush.msra.mxu0 %v596
      %805 = vmatpush.msra.mxu0 %v592
      %806 = vmatpush.msra.mxu0 %v588
      %807 = vmatpush.msra.mxu0 %v584
      %808 = vmatpush.msra.mxu0 %v580
      %809 = vmatpush.msra.mxu0 %v576
      %810 = vmatpush.msra.mxu0 %v572
      %811 = vmatpush.msra.mxu0 %v568
      %812 = vmatpush.msra.mxu0 %v564
      %813 = vmatmul.f32.gmra.mxu0 %v760
      %v814 = vpop.f32.mrf.mxu0
      %v815 = vadd.f32 0.0, %v814
      %816 = vmatmul.f32.gmra.mxu0 %v761
      %v817 = vpop.f32.mrf.mxu0
      %v818 = vadd.f32 0.0, %v817
      %819 = vmatmul.f32.gmra.mxu0 %v762
      %v820 = vpop.f32.mrf.mxu0
      %v821 = vadd.f32 0.0, %v820
      %822 = vmatmul.f32.gmra.mxu0 %v763
      %v823 = vpop.f32.mrf.mxu0
      %v824 = vadd.f32 0.0, %v823
      %825 = vmatmul.f32.gmra.mxu0 %v764
      %v826 = vpop.f32.mrf.mxu0
      %v827 = vadd.f32 0.0, %v826
      %828 = vdwg.mxu0
      %829 = vmatpush.msra.mxu0 %v625
      %830 = vmatpush.msra.mxu0 %v621
      %831 = vmatpush.msra.mxu0 %v617
      %832 = vmatpush.msra.mxu0 %v613
      %833 = vmatpush.msra.mxu0 %v609
      %834 = vmatpush.msra.mxu0 %v605
      %835 = vmatpush.msra.mxu0 %v601
      %836 = vmatpush.msra.mxu0 %v597
      %837 = vmatpush.msra.mxu0 %v593
      %838 = vmatpush.msra.mxu0 %v589
      %839 = vmatpush.msra.mxu0 %v585
      %840 = vmatpush.msra.mxu0 %v581
      %841 = vmatpush.msra.mxu0 %v577
      %842 = vmatpush.msra.mxu0 %v573
      %843 = vmatpush.msra.mxu0 %v569
      %844 = vmatpush.msra.mxu0 %v565
      %845 = vmatmul.f32.gmra.mxu0 %v760
      %v846 = vpop.f32.mrf.mxu0
      %v847 = vadd.f32 0.0, %v846
      %848 = vmatmul.f32.gmra.mxu0 %v761
      %v849 = vpop.f32.mrf.mxu0
      %v850 = vadd.f32 0.0, %v849
      %851 = vmatmul.f32.gmra.mxu0 %v762
      %v852 = vpop.f32.mrf.mxu0
      %v853 = vadd.f32 0.0, %v852
      %854 = vmatmul.f32.gmra.mxu0 %v763
      %v855 = vpop.f32.mrf.mxu0
      %v856 = vadd.f32 0.0, %v855
      %857 = vmatmul.f32.gmra.mxu0 %v764
      %v858 = vpop.f32.mrf.mxu0
      %v859 = vadd.f32 0.0, %v858
      %860 = vdwg.mxu0
      %861 = vmatpush.msra.mxu0 %v626
      %862 = vmatpush.msra.mxu0 %v622
      %863 = vmatpush.msra.mxu0 %v618
      %864 = vmatpush.msra.mxu0 %v614
      %865 = vmatpush.msra.mxu0 %v610
      %866 = vmatpush.msra.mxu0 %v606
      %867 = vmatpush.msra.mxu0 %v602
      %868 = vmatpush.msra.mxu0 %v598
      %869 = vmatpush.msra.mxu0 %v594
      %870 = vmatpush.msra.mxu0 %v590
      %871 = vmatpush.msra.mxu0 %v586
      %872 = vmatpush.msra.mxu0 %v582
      %873 = vmatpush.msra.mxu0 %v578
      %874 = vmatpush.msra.mxu0 %v574
      %875 = vmatpush.msra.mxu0 %v570
      %876 = vmatpush.msra.mxu0 %v566
      %877 = vmatmul.f32.gmra.mxu0 %v760
      %v878 = vpop.f32.mrf.mxu0
      %v879 = vadd.f32 0.0, %v878
      %880 = vmatmul.f32.gmra.mxu0 %v761
      %v881 = vpop.f32.mrf.mxu0
      %v882 = vadd.f32 0.0, %v881
      %883 = vmatmul.f32.gmra.mxu0 %v762
      %v884 = vpop.f32.mrf.mxu0
      %v885 = vadd.f32 0.0, %v884
      %886 = vmatmul.f32.gmra.mxu0 %v763
      %v887 = vpop.f32.mrf.mxu0
      %v888 = vadd.f32 0.0, %v887
      %889 = vmatmul.f32.gmra.mxu0 %v764
      %v890 = vpop.f32.mrf.mxu0
      %v891 = vadd.f32 0.0, %v890
      %892 = vdwg.mxu0
      %v893 = vmul.f32 %v650, %v783
      %v894 = vmul.f32 %v682, %v815
      %v895 = vmul.f32 %v714, %v847
      %v896 = vmul.f32 %v746, %v879
      %v897 = vmul.f32 %v653, %v786
      %v898 = vmul.f32 %v685, %v818
      %v899 = vmul.f32 %v717, %v850
      %v900 = vmul.f32 %v749, %v882
      %v901 = vmul.f32 %v656, %v789
      %v902 = vmul.f32 %v688, %v821
      %v903 = vmul.f32 %v720, %v853
      %v904 = vmul.f32 %v752, %v885
      %v905 = vmul.f32 %v659, %v792
      %v906 = vmul.f32 %v691, %v824
      %v907 = vmul.f32 %v723, %v856
      %v908 = vmul.f32 %v755, %v888
      %v909 = vmul.f32 %v662, %v795
      %v910 = vmul.f32 %v694, %v827
      %v911 = vmul.f32 %v726, %v859
      %v912 = vmul.f32 %v758, %v891
      %v913 = vadd.f32 %v893, %v897
      %v914 = vadd.f32 %v913, %v901
      %v915 = vadd.f32 %v914, %v905
      %vm916 = vcmask 1041408
      %v917 = vsel %vm916, %v909, 0.0
      %v918 = vadd.f32 %v915, %v917
      %v919 = vrot.slane %v918, 4
      %v920 = vadd.f32 %v918, %v919
      %v921 = vrot.slane %v920, 2
      %v922 = vadd.f32 %v920, %v921
      %v923 = vrot.slane %v922, 1
      %v924 = vadd.f32 %v922, %v923
      %v925 = vadd.f32 %v894, %v898
      %v926 = vadd.f32 %v925, %v902
      %v927 = vadd.f32 %v926, %v906
      %v928 = vsel %vm916, %v910, 0.0
      %v929 = vadd.f32 %v927, %v928
      %v930 = vrot.slane %v929, 4
      %v931 = vadd.f32 %v929, %v930
      %v932 = vrot.slane %v931, 2
      %v933 = vadd.f32 %v931, %v932
      %v934 = vrot.slane %v933, 1
      %v935 = vadd.f32 %v933, %v934
      %v936 = vadd.f32 %v895, %v899
      %v937 = vadd.f32 %v936, %v903
      %v938 = vadd.f32 %v937, %v907
      %v939 = vsel %vm916, %v911, 0.0
      %v940 = vadd.f32 %v938, %v939
      %v941 = vrot.slane %v940, 4
      %v942 = vadd.f32 %v940, %v941
      %v943 = vrot.slane %v942, 2
      %v944 = vadd.f32 %v942, %v943
      %v945 = vrot.slane %v944, 1
      %v946 = vadd.f32 %v944, %v945
      %v947 = vadd.f32 %v896, %v900
      %v948 = vadd.f32 %v947, %v904
      %v949 = vadd.f32 %v948, %v908
      %v950 = vsel %vm916, %v912, 0.0
      %v951 = vadd.f32 %v949, %v950
      %v952 = vrot.slane %v951, 4
      %v953 = vadd.f32 %v951, %v952
      %v954 = vrot.slane %v953, 2
      %v955 = vadd.f32 %v953, %v954
      %v956 = vrot.slane %v955, 1
      %v957 = vadd.f32 %v955, %v956
      %v958 = vld [vmem:[%s210] sm:$0xf]
      %v959 = vlog2.pop %v958
      %v960 = vmul.f32 %v959, 0.6931472
      %v962 = vperm.slane %v960, 0
      %v963 = vperm.slane %v960, 1
      %v964 = vperm.slane %v960, 2
      %v965 = vperm.slane %v960, 3
      %v970 = vsub.f32 %v924, %v962
      %v971 = vsub.f32 %v935, %v963
      %v972 = vsub.f32 %v946, %v964
      %v973 = vsub.f32 %v957, %v965
      %vm974 = vcmp.lt.f32.partialorder %v958, 2.0
      %v975 = vrcp.pop 2.0
      %v976 = vmul.f32 2.0, %v975
      %v977 = vsub.f32 1.0, %v976
      %v978 = vmul.f32 %v975, %v977
      %v979 = vadd.f32 %v975, %v978
      %vm980 = vweird.f32 %v975
      %v981 = vsel %vm980, %v975, %v979
      %v982 = vmul.f32 %v958, %v981
      %v983 = vpow.f32 %v982, 0.75
      %v984 = vsel %vm974, %v983, 1.0
      %v985 = vmul.f32 %v970, %v970
      %v986 = vmul.f32 %v971, %v971
      %v987 = vmul.f32 %v972, %v972
      %v988 = vmul.f32 %v973, %v973
      %v990 = vperm.slane %v984, 0
      %v991 = vperm.slane %v984, 1
      %v992 = vperm.slane %v984, 2
      %v993 = vperm.slane %v984, 3
      %v998 = vmul.f32 %v985, %v990
      %v999 = vmul.f32 %v986, %v991
      %v1000 = vmul.f32 %v987, %v992
      %v1001 = vmul.f32 %v988, %v993
      %s1002 = smul.u32 %s15, 512
      %v1003 = vlaneseq
      %v1004 = vand.u32 %v1003, 127
      %v1005 = vadd.s32 %v1004, 128
      %v1006 = vadd.s32 %v1004, 256
      %v1007 = vadd.s32 %v1004, 384
      %v1008 = vstv %s1002
      %v1009 = vadd.s32 %v1008, %v1004
      %v1010 = vadd.s32 %v1008, %v1005
      %v1011 = vadd.s32 %v1008, %v1006
      %v1012 = vadd.s32 %v1008, %v1007
      %vm1013 = vcmp.lt.s32.totalorder %v1009, 1000
      %vm1014 = vcmp.lt.s32.totalorder %v1010, 1000
      %vm1015 = vcmp.lt.s32.totalorder %v1011, 1000
      %vm1016 = vcmp.lt.s32.totalorder %v1012, 1000
      %v1017 = vsel %vm1013, %v998, 0.0
      %v1018 = vsel %vm1014, %v999, 0.0
      %v1019 = vsel %vm1015, %v1000, 0.0
      %v1020 = vsel %vm1016, %v1001, 0.0
      %vm1021 = vcmask 1040384
      %v1022 = vsel %vm1021, %v1017, 0.0
      %v1023 = vsel %vm1021, %v1018, 0.0
      %v1024 = vadd.f32 %v1022, %v1023
      %v1025 = vsel %vm1021, %v1019, 0.0
      %v1026 = vadd.f32 %v1024, %v1025
      %v1027 = vsel %vm1021, %v1020, 0.0
      %v1028 = vadd.f32 %v1026, %v1027
      %1029 = vadd.xlane.f32.xlu0 %v1028
      %v1030 = vpop.xlane.xlu0 %1029
      %v1031 = vrot.slane %v1030, 4
      %v1032 = vadd.f32 %v1030, %v1031
      %v1033 = vrot.slane %v1032, 2
      %v1034 = vadd.f32 %v1032, %v1033
      %v1035 = vrot.slane %v1034, 1
      %v1036 = vadd.f32 %v1034, %v1035
      %s1037 = vtos %v1036
      %vm1038 = vcmp.eq.s32.totalorder %v1004, 0
      %v1039 = vstv %s1037
      %v1040 = vsel %vm1038, %v1039, 0.0
      %1041 = vst [vmem:[%s214] sm:$0x1] %v1040
      %p1042 = scmp.lt.s32.totalorder %s15, 1
      %s1043 = scalar_select %p1042, %s15, 1
      %s1044 = scalar_lea.vmem %s4, %s1043
      // Predicated region
      $region37: #{glove_loss.1} parent=35 // pred_check
        %p1045 = pneg %p127
      $region38: #{glove_loss.1} parent=35 // pred_check_branch
        %1047 = sbr.rel (%p1045) target = $region40
      $region39: #{glove_loss.1} parent=35 // pred_region
        _
      $region40: #{glove_loss.1} parent=35 // pred_fallthru
        _
    $region36: #{glove_loss.1} parent=5 // pred_fallthru
      _
    %p1048 = scmp.le.s32.totalorder 2, %s10
    // Predicated region
    $region41: #{glove_loss.1} parent=5 // pred_check
      %p1049 = pneg %p1048
    $region42: #{glove_loss.1} parent=5 // pred_check_branch
      %1051 = sbr.rel (%p1049) target = $region44
    $region43: #{glove_loss.1} parent=5 // pred_region
      %s1052 = ssub.s32 %s10, 2
      // Predicated region
      $region45: #{glove_loss.1} parent=43 // pred_check
        %p1053 = pneg %p133
      $region46: #{glove_loss.1} parent=43 // pred_check_branch
        %1055 = sbr.rel (%p1053) target = $region48
      $region47: #{glove_loss.1} parent=43 // pred_region
        %p1056 = scmp.lt.s32.totalorder %s16, 1
        %s1057 = scalar_select %p1056, %s16, 1
        %s1058 = scalar_lea.vmem %s4, %s1057
      $region48: #{glove_loss.1} parent=43 // pred_fallthru
        _
    $region44: #{glove_loss.1} parent=5 // pred_fallthru
      _
  $region6: #{glove_loss.1} parent=0 // loop_footer
    %s14 = sadd.s32 1, %s10
  $region7: #{glove_loss.1} parent=0 // loop_footer_branch
    %9 = sbr.rel target = $region3
  $region8: #{glove_loss.1} parent=0 // loop_exit
    _

</llo_original>
